<compile_context>
chip_gen: v7x
topology: tpu7x:2x2x1
jax: 0.10.0
libtpu: 0.0.40
codegen_flags: <defaults>
</compile_context>

<pallas_src>
import jax
import jax.numpy as jnp
from jax.experimental import pallas as pl
from jax.experimental.pallas import tpu as pltpu


NEG_SLOPE = 0.01   # PyTorch F.leaky_relu / nn.LeakyReLU default
LN_EPS = 1e-5      # PyTorch nn.LayerNorm default


def _round_up(n: int, m: int) -> int:
    return (n + m - 1) // m * m


def _leaky_relu(x):
    return jnp.where(x >= 0, x, NEG_SLOPE * x)


def _make_kernel(n_layers: int, f_out: int, f_pad: int, scale: float, compute_dtype):
    inv_n = 1.0 / float(f_out)
    slope2 = NEG_SLOPE * NEG_SLOPE
    pad_f = float(f_pad - f_out)

    def kernel(x_ref, w0_ref, b0_ref, wl_ref, bl_ref, o_ref):
        x = x_ref[...].astype(compute_dtype)

        # --- embd Linear (SlowNorm pre-folded into W0/b0) + outer leaky_relu ---
        h = jnp.dot(x, w0_ref[...], preferred_element_type=jnp.float32) + b0_ref[...]
        h = jnp.where(h >= 0, h, NEG_SLOPE * h)

        # --- residual blocks: leaky_relu(leaky_relu(W h + b)) + h (fused slope^2) ---
        def block(h, w, b):
            y = jnp.dot(h.astype(compute_dtype), w,
                        preferred_element_type=jnp.float32) + b
            y = jnp.where(y >= 0, y, slope2 * y)
            return y + h

        if n_layers <= 4:
            for i in range(n_layers):            # small count: static unroll is fine
                h = block(h, wl_ref[i], bl_ref[i])
        else:
            # bound vreg live ranges; dynamic first-axis index into stacked weights
            h = jax.lax.fori_loop(
                0, n_layers, lambda i, hh: block(hh, wl_ref[i], bl_ref[i]), h)

        # --- LayerNorm over the true f_out lanes (no affine, eps=1e-5).
        # Padded lanes of h are exactly 0 by construction, so:
        #   sum(h) over all lanes == sum over true lanes  (mu is exact), and
        #   c = h - mu has -mu in the padded lanes, hence
        #   sum(c*c, all) = sum(c*c, true) + pad_f * mu^2  -> algebraic correction,
        # no iota/compare/select needed.  `scale` folded into the rsqrt. ---
        mu = jnp.sum(h, axis=-1, keepdims=True) * inv_n
        c = h - mu
        var = (jnp.sum(c * c, axis=-1, keepdims=True) - pad_f * (mu * mu)) * inv_n
        r = jax.lax.rsqrt(var + LN_EPS) * scale
        o_ref[...] = (c[:, :f_out] * r).astype(o_ref.dtype)

    return kernel


def feature_embedder_forward(x, params, *, n_layers: int, scale: float,
                             block_b: int = 1024,
                             matmul_dtype=jnp.bfloat16,
                             out_dtype=jnp.bfloat16):
    """x: (B, F_in). params: dict with mean, std, w0, b0, w_i/b_i (i=1..n_layers).

    Weights are stored (in_features, out_features) so the kernel computes x @ W + b.
    Returns a (B, F_out) array of dtype `out_dtype`.
    """
    assert n_layers >= 1
    B, F_in = x.shape
    F_out = params["w0"].shape[1]
    f_pad = _round_up(F_out, 128)     # lane-dense intermediate / MXU-friendly N and K
    pad_f = f_pad - F_out

    # --- fold SlowNorm buffers into the first Linear (offline, exact in f32) ---
    inv = 1.0 / (params["std"].astype(jnp.float32) + 0.001)
    w0f = params["w0"].astype(jnp.float32)
    w0 = w0f * inv[:, None]
    b0 = params["b0"].astype(jnp.float32) - (params["mean"].astype(jnp.float32) * inv) @ w0f

    # --- zero-pad feature-out dim to f_pad (padded lanes stay exactly zero) ---
    w0 = jnp.pad(w0, ((0, 0), (0, pad_f)))
    b0 = jnp.pad(b0, (0, pad_f)).reshape(1, f_pad)
    wl = jnp.stack([
        jnp.pad(params[f"w{i + 1}"].astype(jnp.float32), ((0, pad_f), (0, pad_f)))
        for i in range(n_layers)
    ])
    bl = jnp.stack([
        jnp.pad(params[f"b{i + 1}"].astype(jnp.float32), (0, pad_f)).reshape(1, f_pad)
        for i in range(n_layers)
    ])

    # Matmul inputs in compute dtype (bf16 on v5e/v6e/v7x); biases stay f32,
    # accumulation is f32 via preferred_element_type.
    w0 = w0.astype(matmul_dtype)
    wl = wl.astype(matmul_dtype)

    # --- batch tiling ---
    # * multiple of 16 (bf16 sublane pack), big blocks amortize per-step overhead
    # * prefer >= 2 grid steps so the "parallel" batch axis can shard across the
    #   two v7x TensorCores (harmless on single-TC v5e/v6e).
    block_b = _round_up(max(16, block_b), 16)
    if B > 16:
        block_b = min(block_b, _round_up(pl.cdiv(B, 2), 16))
    block_b = min(block_b, _round_up(B, 16))
    b_pad = _round_up(B, block_b)
    grid = (b_pad // block_b,)

    xk = x.astype(matmul_dtype)
    if b_pad != B:
        xk = jnp.pad(xk, ((0, b_pad - B), (0, 0)))

    kernel = _make_kernel(n_layers, F_out, f_pad, scale, matmul_dtype)

    bpw = jnp.dtype(matmul_dtype).itemsize
    obw = jnp.dtype(out_dtype).itemsize

    # Advisory cost hint for XLA's scheduler.
    flops = 2 * b_pad * F_in * f_pad + 2 * n_layers * b_pad * f_pad * f_pad
    bytes_accessed = (b_pad * F_in * bpw                                # x
                      + (F_in * f_pad + n_layers * f_pad * f_pad) * bpw  # weights
                      + (1 + n_layers) * f_pad * 4                       # biases (f32)
                      + b_pad * F_out * obw)                             # output
    cost = pl.CostEstimate(flops=flops, transcendentals=b_pad,
                           bytes_accessed=bytes_accessed)

    # VMEM budget: actual footprint (double-buffered streams + weights + f32
    # scratch for h/y) with headroom, capped well below a v7x TC's 64 MiB.
    weight_bytes = ((F_in * f_pad + n_layers * f_pad * f_pad) * bpw
                    + (1 + n_layers) * f_pad * 4)
    stream_bytes = 2 * (block_b * F_in * bpw + block_b * F_out * obw)   # double-buffered
    scratch_bytes = 4 * block_b * f_pad * 4                             # h, y, temps (f32)
    need = 2 * weight_bytes + stream_bytes + scratch_bytes
    vmem_limit = int(min(32 * 1024 * 1024, max(8 * 1024 * 1024, 2 * need)))

    out = pl.pallas_call(
        kernel,
        out_shape=jax.ShapeDtypeStruct((b_pad, F_out), out_dtype),
        grid_spec=pltpu.PrefetchScalarGridSpec(
            num_scalar_prefetch=0,
            grid=grid,
            in_specs=[
                pl.BlockSpec((block_b, F_in), lambda i: (i, 0)),          # x (blocked over batch)
                pl.BlockSpec((F_in, f_pad), lambda i: (0, 0)),            # W0' (SlowNorm folded)
                pl.BlockSpec((1, f_pad), lambda i: (0, 0)),               # b0'
                pl.BlockSpec((n_layers, f_pad, f_pad), lambda i: (0, 0, 0)),  # stacked layer weights
                pl.BlockSpec((n_layers, 1, f_pad), lambda i: (0, 0, 0)),      # stacked layer biases
            ],
            # Last dim == full array last dim (F_out) -> legal un-padded store;
            # ~4-8x fewer output HBM bytes than the padded f32 layout.
            out_specs=pl.BlockSpec((block_b, F_out), lambda i: (i, 0)),
        ),
        compiler_params=pltpu.CompilerParams(
            dimension_semantics=("parallel",),   # batch axis shards across TCs (v7x megacore)
            vmem_limit_bytes=vmem_limit,
        ),
        cost_estimate=cost,
    )(xk, w0, b0, wl, bl)

    return out[:B] if b_pad != B else out


def init_params(key, feature_in: int, feature_embed_out: int, n_layers: int):
    """Synthetic init mimicking nn.Linear uniform(-1/sqrt(fan_in), +); nontrivial
    SlowNorm buffers so the offline folding path is actually exercised."""
    params = {}
    keys = jax.random.split(key, n_layers + 3)
    params["mean"] = 0.1 * jax.random.normal(keys[0], (feature_in,), jnp.float32)
    params["std"] = jax.random.uniform(keys[1], (feature_in,), jnp.float32, 0.5, 1.5)

    def linear_init(k, fan_in, fan_out):
        kw, kb = jax.random.split(k)
        bound = 1.0 / jnp.sqrt(jnp.float32(fan_in))
        w = jax.random.uniform(kw, (fan_in, fan_out), jnp.float32, -bound, bound)
        b = jax.random.uniform(kb, (fan_out,), jnp.float32, -bound, bound)
        return w, b

    params["w0"], params["b0"] = linear_init(keys[2], feature_in, feature_embed_out)
    for i in range(n_layers):
        w, b = linear_init(keys[3 + i], feature_embed_out, feature_embed_out)
        params[f"w{i + 1}"] = w
        params[f"b{i + 1}"] = b
    return params


def reference_forward(x, params, *, n_layers: int, scale: float):
    """Pure-JAX fp32 reference replicating the PyTorch forward (eval mode)."""
    h = (x - params["mean"]) / (params["std"] + 0.001)
    h = h @ params["w0"] + params["b0"]
    h = _leaky_relu(h)
    for i in range(n_layers):
        y = h @ params[f"w{i + 1}"] + params[f"b{i + 1}"]
        y = _leaky_relu(_leaky_relu(y))
        h = y + h
    mu = jnp.mean(h, axis=-1, keepdims=True)
    var = jnp.mean((h - mu) ** 2, axis=-1, keepdims=True)
    h = (h - mu) * jax.lax.rsqrt(var + LN_EPS)
    return h * scale


if __name__ == "__main__":
    B = 40              # not a multiple of block_b -> exercises batch padding + 2-step grid
    FEATURE_IN = 16
    FEATURE_OUT = 32    # intermediate padded to 128 lanes inside the wrapper
    N_LAYERS = 2
    SCALE = 0.5

    key = jax.random.PRNGKey(0)
    k_x, k_p = jax.random.split(key)
    x = jax.random.normal(k_x, (B, FEATURE_IN), jnp.float32)
    params = init_params(k_p, FEATURE_IN, FEATURE_OUT, N_LAYERS)
    ref = reference_forward(x, params, n_layers=N_LAYERS, scale=SCALE)

    # Exact path (f32 matmuls, f32 output) — tight check.
    out_f32 = feature_embedder_forward(x, params, n_layers=N_LAYERS, scale=SCALE,
                                       matmul_dtype=jnp.float32, out_dtype=jnp.float32)
    out_f32 = jax.block_until_ready(out_f32)
    assert out_f32.shape == (B, FEATURE_OUT)
    assert jnp.allclose(out_f32, ref, atol=1e-4, rtol=1e-4), "f32 kernel mismatch vs reference"

    # Performance path (bf16 matmul inputs + bf16 output, f32 accumulation) — loose check.
    out_bf16 = feature_embedder_forward(x, params, n_layers=N_LAYERS, scale=SCALE)
    out_bf16 = jax.block_until_ready(out_bf16)
    assert out_bf16.shape == (B, FEATURE_OUT)
    assert out_bf16.dtype == jnp.bfloat16
    assert jnp.allclose(out_bf16.astype(jnp.float32), ref, atol=1e-1, rtol=1e-1), \
        "bf16 kernel mismatch vs reference"

    # Deeper stack exercises the fori_loop branch (n_layers > 4).
    N_DEEP = 6
    params_d = init_params(jax.random.PRNGKey(1), FEATURE_IN, FEATURE_OUT, N_DEEP)
    ref_d = reference_forward(x, params_d, n_layers=N_DEEP, scale=SCALE)
    out_d = feature_embedder_forward(x, params_d, n_layers=N_DEEP, scale=SCALE,
                                     matmul_dtype=jnp.float32, out_dtype=jnp.float32)
    out_d = jax.block_until_ready(out_d)
    assert jnp.allclose(out_d, ref_d, atol=1e-4, rtol=1e-4), "deep-stack kernel mismatch"

    print("KERNEL_OK")
</pallas_src>

<mosaic_0001>
module attributes {stable_mosaic.version = 11 : i64} {
  func.func @kernel(%arg0: i32, %arg1: memref<32x16xf32, #tpu.memory_space<vmem>>, %arg2: memref<16x128xf32, #tpu.memory_space<vmem>>, %arg3: memref<1x128xf32, #tpu.memory_space<vmem>>, %arg4: memref<2x128x128xf32, #tpu.memory_space<vmem>>, %arg5: memref<2x1x128xf32, #tpu.memory_space<vmem>>, %arg6: memref<32x32xf32, #tpu.memory_space<vmem>>) attributes {dimension_semantics = [#tpu.dimension_semantics<parallel>], iteration_bounds = array<i64: 2>, scalar_prefetch = 0 : i64, scratch_operands = 0 : i64, tpu.core_type = #tpu.core_type<tc>, window_params = [{transform_indices = @transform_0, window_bounds = array<i64: 32, 16>}, {pipeline_mode = #tpu.pipeline_mode<synchronous>, transform_indices = @transform_1, window_bounds = array<i64: 16, 128>}, {pipeline_mode = #tpu.pipeline_mode<synchronous>, transform_indices = @transform_2, window_bounds = array<i64: 1, 128>}, {pipeline_mode = #tpu.pipeline_mode<synchronous>, transform_indices = @transform_3, window_bounds = array<i64: 2, 128, 128>}, {pipeline_mode = #tpu.pipeline_mode<synchronous>, transform_indices = @transform_4, window_bounds = array<i64: 2, 1, 128>}, {transform_indices = @transform_5, window_bounds = array<i64: 32, 32>}]} {
    %c0 = arith.constant 0 : index
    %c0_0 = arith.constant 0 : index
    %0 = vector.load %arg1[%c0, %c0_0] : memref<32x16xf32, #tpu.memory_space<vmem>>, vector<32x16xf32>
    %c0_1 = arith.constant 0 : index
    %c0_2 = arith.constant 0 : index
    %1 = vector.load %arg2[%c0_1, %c0_2] : memref<16x128xf32, #tpu.memory_space<vmem>>, vector<16x128xf32>
    %cst = arith.constant dense<0.000000e+00> : vector<32x128xf32>
    %2 = tpu.matmul %0, %1, %cst {dimension_numbers = #tpu.dot_dimension_numbers<[1], [0], [0], [1], [0, 0, 1, 1], [], []>} : vector<32x16xf32>, vector<16x128xf32>, vector<32x128xf32> -> vector<32x128xf32>
    %c0_3 = arith.constant 0 : index
    %c0_4 = arith.constant 0 : index
    %3 = vector.load %arg3[%c0_3, %c0_4] : memref<1x128xf32, #tpu.memory_space<vmem>>, vector<1x128xf32>
    %4 = vector.broadcast %3 : vector<1x128xf32> to vector<32x128xf32>
    %5 = arith.addf %2, %4 : vector<32x128xf32>
    %cst_5 = arith.constant 0.000000e+00 : f32
    %6 = vector.broadcast %cst_5 : f32 to vector<32x128xf32>
    %7 = arith.cmpf oge, %5, %6 : vector<32x128xf32>
    %cst_6 = arith.constant 0.00999999977 : f32
    %8 = vector.broadcast %cst_6 : f32 to vector<32x128xf32>
    %9 = arith.mulf %8, %5 : vector<32x128xf32>
    %10 = arith.select %7, %5, %9 : vector<32x128xi1>, vector<32x128xf32>
    %c0_7 = arith.constant 0 : index
    %c0_8 = arith.constant 0 : index
    %c0_9 = arith.constant 0 : index
    %11 = vector.load %arg4[%c0_7, %c0_8, %c0_9] : memref<2x128x128xf32, #tpu.memory_space<vmem>>, vector<1x128x128xf32>
    %12 = vector.shape_cast %11 : vector<1x128x128xf32> to vector<128x128xf32>
    %c0_10 = arith.constant 0 : index
    %c0_11 = arith.constant 0 : index
    %c0_12 = arith.constant 0 : index
    %13 = vector.load %arg5[%c0_10, %c0_11, %c0_12] : memref<2x1x128xf32, #tpu.memory_space<vmem>>, vector<1x1x128xf32>
    %14 = vector.shape_cast %13 : vector<1x1x128xf32> to vector<1x128xf32>
    %cst_13 = arith.constant dense<0.000000e+00> : vector<32x128xf32>
    %15 = tpu.matmul %10, %12, %cst_13 {dimension_numbers = #tpu.dot_dimension_numbers<[1], [0], [0], [1], [0, 0, 1, 1], [], []>} : vector<32x128xf32>, vector<128x128xf32>, vector<32x128xf32> -> vector<32x128xf32>
    %16 = vector.broadcast %14 : vector<1x128xf32> to vector<32x128xf32>
    %17 = arith.addf %15, %16 : vector<32x128xf32>
    %cst_14 = arith.constant 0.000000e+00 : f32
    %18 = vector.broadcast %cst_14 : f32 to vector<32x128xf32>
    %19 = arith.cmpf oge, %17, %18 : vector<32x128xf32>
    %cst_15 = arith.constant 9.99999974E-5 : f32
    %20 = vector.broadcast %cst_15 : f32 to vector<32x128xf32>
    %21 = arith.mulf %20, %17 : vector<32x128xf32>
    %22 = arith.select %19, %17, %21 : vector<32x128xi1>, vector<32x128xf32>
    %23 = arith.addf %22, %10 : vector<32x128xf32>
    %c1 = arith.constant 1 : index
    %c0_16 = arith.constant 0 : index
    %c0_17 = arith.constant 0 : index
    %24 = vector.load %arg4[%c1, %c0_16, %c0_17] : memref<2x128x128xf32, #tpu.memory_space<vmem>>, vector<1x128x128xf32>
    %25 = vector.shape_cast %24 : vector<1x128x128xf32> to vector<128x128xf32>
    %c1_18 = arith.constant 1 : index
    %c0_19 = arith.constant 0 : index
    %c0_20 = arith.constant 0 : index
    %26 = vector.load %arg5[%c1_18, %c0_19, %c0_20] : memref<2x1x128xf32, #tpu.memory_space<vmem>>, vector<1x1x128xf32>
    %27 = vector.shape_cast %26 : vector<1x1x128xf32> to vector<1x128xf32>
    %cst_21 = arith.constant dense<0.000000e+00> : vector<32x128xf32>
    %28 = tpu.matmul %23, %25, %cst_21 {dimension_numbers = #tpu.dot_dimension_numbers<[1], [0], [0], [1], [0, 0, 1, 1], [], []>} : vector<32x128xf32>, vector<128x128xf32>, vector<32x128xf32> -> vector<32x128xf32>
    %29 = vector.broadcast %27 : vector<1x128xf32> to vector<32x128xf32>
    %30 = arith.addf %28, %29 : vector<32x128xf32>
    %cst_22 = arith.constant 0.000000e+00 : f32
    %31 = vector.broadcast %cst_22 : f32 to vector<32x128xf32>
    %32 = arith.cmpf oge, %30, %31 : vector<32x128xf32>
    %cst_23 = arith.constant 9.99999974E-5 : f32
    %33 = vector.broadcast %cst_23 : f32 to vector<32x128xf32>
    %34 = arith.mulf %33, %30 : vector<32x128xf32>
    %35 = arith.select %32, %30, %34 : vector<32x128xi1>, vector<32x128xf32>
    %36 = arith.addf %35, %23 : vector<32x128xf32>
    %cst_24 = arith.constant dense<0.000000e+00> : vector<32xf32>
    %37 = vector.multi_reduction <add>, %36, %cst_24 [1] : vector<32x128xf32> to vector<32xf32>
    %38 = vector.shape_cast %37 : vector<32xf32> to vector<32x1xf32>
    %cst_25 = arith.constant 3.125000e-02 : f32
    %39 = vector.broadcast %cst_25 : f32 to vector<32x1xf32>
    %40 = arith.mulf %38, %39 : vector<32x1xf32>
    %41 = vector.broadcast %40 : vector<32x1xf32> to vector<32x128xf32>
    %42 = arith.subf %36, %41 : vector<32x128xf32>
    %43 = arith.mulf %42, %42 : vector<32x128xf32>
    %cst_26 = arith.constant dense<0.000000e+00> : vector<32xf32>
    %44 = vector.multi_reduction <add>, %43, %cst_26 [1] : vector<32x128xf32> to vector<32xf32>
    %45 = vector.shape_cast %44 : vector<32xf32> to vector<32x1xf32>
    %46 = arith.mulf %40, %40 : vector<32x1xf32>
    %cst_27 = arith.constant 9.600000e+01 : f32
    %47 = vector.broadcast %cst_27 : f32 to vector<32x1xf32>
    %48 = arith.mulf %47, %46 : vector<32x1xf32>
    %49 = arith.subf %45, %48 : vector<32x1xf32>
    %cst_28 = arith.constant 3.125000e-02 : f32
    %50 = vector.broadcast %cst_28 : f32 to vector<32x1xf32>
    %51 = arith.mulf %49, %50 : vector<32x1xf32>
    %cst_29 = arith.constant 9.99999974E-6 : f32
    %52 = vector.broadcast %cst_29 : f32 to vector<32x1xf32>
    %53 = arith.addf %51, %52 : vector<32x1xf32>
    %54 = math.rsqrt %53 : vector<32x1xf32>
    %cst_30 = arith.constant 5.000000e-01 : f32
    %55 = vector.broadcast %cst_30 : f32 to vector<32x1xf32>
    %56 = arith.mulf %54, %55 : vector<32x1xf32>
    %57 = vector.extract_strided_slice %42 {offsets = [0, 0], sizes = [32, 32], strides = [1, 1]} : vector<32x128xf32> to vector<32x32xf32>
    %58 = vector.broadcast %56 : vector<32x1xf32> to vector<32x32xf32>
    %59 = arith.mulf %57, %58 : vector<32x32xf32>
    %c0_31 = arith.constant 0 : index
    %c0_32 = arith.constant 0 : index
    %60 = vector.load %arg6[%c0_31, %c0_32] : memref<32x32xf32, #tpu.memory_space<vmem>>, vector<32x32xf32>
    tpu.vector_store %arg6[%c0_31, %c0_32], %59 {strides = array<i32>} : memref<32x32xf32, #tpu.memory_space<vmem>>, vector<32x32xf32>,
    return
  }
  func.func @transform_0(%arg0: i32) -> (i32, i32) {
    %c0_i32 = arith.constant 0 : i32
    %c0_i32_0 = arith.constant 0 : i32
    return %arg0, %c0_i32 : i32, i32
  }
  func.func @transform_1(%arg0: i32) -> (i32, i32) {
    %c0_i32 = arith.constant 0 : i32
    %c0_i32_0 = arith.constant 0 : i32
    %c0_i32_1 = arith.constant 0 : i32
    return %c0_i32, %c0_i32_0 : i32, i32
  }
  func.func @transform_2(%arg0: i32) -> (i32, i32) {
    %c0_i32 = arith.constant 0 : i32
    %c0_i32_0 = arith.constant 0 : i32
    %c0_i32_1 = arith.constant 0 : i32
    return %c0_i32, %c0_i32_0 : i32, i32
  }
  func.func @transform_3(%arg0: i32) -> (i32, i32, i32) {
    %c0_i32 = arith.constant 0 : i32
    %c0_i32_0 = arith.constant 0 : i32
    %c0_i32_1 = arith.constant 0 : i32
    %c0_i32_2 = arith.constant 0 : i32
    return %c0_i32, %c0_i32_0, %c0_i32_1 : i32, i32, i32
  }
  func.func @transform_4(%arg0: i32) -> (i32, i32, i32) {
    %c0_i32 = arith.constant 0 : i32
    %c0_i32_0 = arith.constant 0 : i32
    %c0_i32_1 = arith.constant 0 : i32
    %c0_i32_2 = arith.constant 0 : i32
    return %c0_i32, %c0_i32_0, %c0_i32_1 : i32, i32, i32
  }
  func.func @transform_5(%arg0: i32) -> (i32, i32) {
    %c0_i32 = arith.constant 0 : i32
    %c0_i32_0 = arith.constant 0 : i32
    return %arg0, %c0_i32 : i32, i32
  }
}

</mosaic_0001>

<llo_original>
// kernel: tpu_custom_call.1
$region0: #{tpu_custom_call.1}
  #allocation0 [shape = 'u32[]', space=smem, size = 0x4, offset = 0x4, fixed_abs, tag = 'smem constant byte address 0x4 - core index']
  #allocation1 [shape = 'u32[144,128]{1,0:T(1,128)}', space=vmem, size = 0x12000, scoped, tag = 'internal scratch']
  %s0 = inlined_call_operand.vmem [shape: f32[64,16], index: 0, kind: input, shape index: {}]
  %s1 = inlined_call_operand.vmem [shape: f32[16,128], index: 1, kind: input, shape index: {}]
  %s2 = inlined_call_operand.vmem [shape: f32[1,128], index: 2, kind: input, shape index: {}]
  %s3 = inlined_call_operand.hbm [shape: f32[2,128,128], index: 3, kind: input, shape index: {}]
  %s4 = inlined_call_operand.vmem [shape: f32[2,1,128], index: 4, kind: input, shape index: {}]
  %s5 = inlined_call_operand.vmem [shape: f32[64,32], index: 5, kind: output, shape index: {}]
  %s6 = sld [smem:[#allocation0]]
  $region57: #{tpu_custom_call.1} parent=0
    _
  %s8 = ssub.s32 1, %s6
  %s9 = scalar_select 0, %s8, %s6
  $region1: #{tpu_custom_call.1} parent=0
    #allocation2 [shape = 'u8[131072]{0}', space=vmem, size = 0x20000, scoped, tag = 'input window, operand 3, single buffered']
    #allocation3 [shape = 's32[2]{0}', space=sflag, size = 0x8, scoped, tag = 'scoped memory for tpu_custom_call.1']
    %10 = vsyncpa [#allocation3], 0
    loop: start=0, step=1, limit=4
    $region2: #{tpu_custom_call.1} parent=1 // loop_pre_header
      _
    $region3: #{tpu_custom_call.1} parent=1 // loop_header
      %s12 = sphi 0, %s16
      %p13 = scmp.ge.s32.totalorder %s12, 4
      %s22 = sphi 0, %s24
      %s25 = sphi 0, %s22
      %s26 = sphi 0, %s25
      %s42 = sphi 0, %s26
      %s46 = sphi 0, %s46
      %s48 = sphi 0, %s46
      %s49 = sphi 0, %s48
      %s63 = sphi 0, %s49
      %s67 = sphi 0, %s67
      %s69 = sphi 0, %s67
      %s70 = sphi 0, %s69
      %s84 = sphi 0, %s70
      %s88 = sphi 0, %s88
      %s90 = sphi 0, %s88
      %s91 = sphi 0, %s90
      %s105 = sphi 0, %s91
      %s109 = sphi 0, %s109
      %s111 = sphi 0, %s109
      %s112 = sphi 0, %s111
      %s126 = sphi 0, %s112
      %s132 = sphi 0, %s134
      %s135 = sphi 0, %s132
      %s136 = sphi 0, %s135
      %s152 = sphi 0, %s136
    $region4: #{tpu_custom_call.1} parent=1 // loop_header_branch
      %15 = sbr.rel (%p13) target = $region8
    $region5: #{tpu_custom_call.1} parent=1 // loop_body
      %s17 = ssub.s32 %s12, 1
      %s18 = ssub.s32 %s12, 2
      %s19 = sadd.s32 %s12, 1
      %s20 = ssub.s32 %s12, %s19
      %p21 = scmp.eq.s32.totalorder %s20, 0
      %s23 = sadd.s32 %s22, 1
      %s24 = scalar_select %p21, %s22, %s23
      %p27 = pneg %p21
      %p28 = scmp.eq.s32.totalorder %s12, 1
      %p29 = por %p27, %p28
      %p30 = scmp.ne.s32.totalorder %s22, %s25
      %p31 = scmp.eq.s32.totalorder %s12, 0
      %p32 = por %p30, %p31
      %p33 = scmp.ne.s32.totalorder %s22, %s25
      %p34 = scmp.eq.s32.totalorder %s17, 1
      %p35 = por %p33, %p34
      %p36 = scmp.ne.s32.totalorder %s25, %s26
      %p37 = scmp.eq.s32.totalorder %s17, 0
      %p38 = por %p36, %p37
      %p39 = scmp.ne.s32.totalorder %s25, %s26
      %p40 = scmp.eq.s32.totalorder %s18, 1
      %p41 = por %p39, %p40
      %p43 = scmp.ne.s32.totalorder %s26, %s42
      %p44 = scmp.eq.s32.totalorder %s18, 0
      %p45 = por %p43, %p44
      %s47 = sadd.s32 %s46, 1
      %p50 = scmp.eq.s32.totalorder %s12, 1
      %p51 = scmp.ne.s32.totalorder %s46, %s48
      %p52 = scmp.eq.s32.totalorder %s12, 0
      %p53 = por %p51, %p52
      %p54 = scmp.ne.s32.totalorder %s46, %s48
      %p55 = scmp.eq.s32.totalorder %s17, 1
      %p56 = por %p54, %p55
      %p57 = scmp.ne.s32.totalorder %s48, %s49
      %p58 = scmp.eq.s32.totalorder %s17, 0
      %p59 = por %p57, %p58
      %p60 = scmp.ne.s32.totalorder %s48, %s49
      %p61 = scmp.eq.s32.totalorder %s18, 1
      %p62 = por %p60, %p61
      %p64 = scmp.ne.s32.totalorder %s49, %s63
      %p65 = scmp.eq.s32.totalorder %s18, 0
      %p66 = por %p64, %p65
      %s68 = sadd.s32 %s67, 1
      %p71 = scmp.eq.s32.totalorder %s12, 1
      %p72 = scmp.ne.s32.totalorder %s67, %s69
      %p73 = scmp.eq.s32.totalorder %s12, 0
      %p74 = por %p72, %p73
      %p75 = scmp.ne.s32.totalorder %s67, %s69
      %p76 = scmp.eq.s32.totalorder %s17, 1
      %p77 = por %p75, %p76
      %p78 = scmp.ne.s32.totalorder %s69, %s70
      %p79 = scmp.eq.s32.totalorder %s17, 0
      %p80 = por %p78, %p79
      %p81 = scmp.ne.s32.totalorder %s69, %s70
      %p82 = scmp.eq.s32.totalorder %s18, 1
      %p83 = por %p81, %p82
      %p85 = scmp.ne.s32.totalorder %s70, %s84
      %p86 = scmp.eq.s32.totalorder %s18, 0
      %p87 = por %p85, %p86
      %s89 = sadd.s32 %s88, 1
      %p92 = scmp.eq.s32.totalorder %s12, 1
      %p93 = scmp.ne.s32.totalorder %s88, %s90
      %p94 = scmp.eq.s32.totalorder %s12, 0
      %p95 = por %p93, %p94
      %p96 = scmp.ne.s32.totalorder %s88, %s90
      %p97 = scmp.eq.s32.totalorder %s17, 1
      %p98 = por %p96, %p97
      %p99 = scmp.ne.s32.totalorder %s90, %s91
      %p100 = scmp.eq.s32.totalorder %s17, 0
      %p101 = por %p99, %p100
      %p102 = scmp.ne.s32.totalorder %s90, %s91
      %p103 = scmp.eq.s32.totalorder %s18, 1
      %p104 = por %p102, %p103
      %p106 = scmp.ne.s32.totalorder %s91, %s105
      %p107 = scmp.eq.s32.totalorder %s18, 0
      %p108 = por %p106, %p107
      %s110 = sadd.s32 %s109, 1
      %p113 = scmp.eq.s32.totalorder %s12, 1
      %p114 = scmp.ne.s32.totalorder %s109, %s111
      %p115 = scmp.eq.s32.totalorder %s12, 0
      %p116 = por %p114, %p115
      %p117 = scmp.ne.s32.totalorder %s109, %s111
      %p118 = scmp.eq.s32.totalorder %s17, 1
      %p119 = por %p117, %p118
      %p120 = scmp.ne.s32.totalorder %s111, %s112
      %p121 = scmp.eq.s32.totalorder %s17, 0
      %p122 = por %p120, %p121
      %p123 = scmp.ne.s32.totalorder %s111, %s112
      %p124 = scmp.eq.s32.totalorder %s18, 1
      %p125 = por %p123, %p124
      %p127 = scmp.ne.s32.totalorder %s112, %s126
      %p128 = scmp.eq.s32.totalorder %s18, 0
      %p129 = por %p127, %p128
      %s130 = ssub.s32 %s12, %s19
      %p131 = scmp.eq.s32.totalorder %s130, 0
      %s133 = sadd.s32 %s132, 1
      %s134 = scalar_select %p131, %s132, %s133
      %p137 = pneg %p131
      %p138 = scmp.eq.s32.totalorder %s12, 1
      %p139 = por %p137, %p138
      %p140 = scmp.ne.s32.totalorder %s132, %s135
      %p141 = scmp.eq.s32.totalorder %s12, 0
      %p142 = por %p140, %p141
      %p143 = scmp.ne.s32.totalorder %s132, %s135
      %p144 = scmp.eq.s32.totalorder %s17, 1
      %p145 = por %p143, %p144
      %p146 = scmp.ne.s32.totalorder %s135, %s136
      %p147 = scmp.eq.s32.totalorder %s17, 0
      %p148 = por %p146, %p147
      %p149 = scmp.ne.s32.totalorder %s135, %s136
      %p150 = scmp.eq.s32.totalorder %s18, 1
      %p151 = por %p149, %p150
      %p153 = scmp.ne.s32.totalorder %s136, %s152
      %p154 = scmp.eq.s32.totalorder %s18, 0
      %p155 = por %p153, %p154
      %p156 = scmp.le.s32.totalorder 1, %s12
      %p157 = scmp.lt.s32.totalorder %s12, 3
      %p158 = pnand %p156, %p157
      %p159 = pneg %p158
      // Predicated region
      $region9: #{tpu_custom_call.1} parent=5 // pred_check
        _
      $region10: #{tpu_custom_call.1} parent=5 // pred_check_branch
        %161 = sbr.rel (%p158) target = $region12
      $region11: #{tpu_custom_call.1} parent=5 // pred_region
        %s162 = ssub.s32 %s12, 1
        // Predicated region
        $region13: #{tpu_custom_call.1} parent=11 // pred_check
          %p163 = pneg %p59
        $region14: #{tpu_custom_call.1} parent=11 // pred_check_branch
          %165 = sbr.rel (%p163) target = $region16
        $region15: #{tpu_custom_call.1} parent=11 // pred_region
          _
        $region16: #{tpu_custom_call.1} parent=11 // pred_fallthru
          _
        // Predicated region
        $region17: #{tpu_custom_call.1} parent=11 // pred_check
          %p166 = pneg %p80
        $region18: #{tpu_custom_call.1} parent=11 // pred_check_branch
          %168 = sbr.rel (%p166) target = $region20
        $region19: #{tpu_custom_call.1} parent=11 // pred_region
          _
        $region20: #{tpu_custom_call.1} parent=11 // pred_fallthru
          _
        // Predicated region
        $region21: #{tpu_custom_call.1} parent=11 // pred_check
          %p169 = pneg %p101
        $region22: #{tpu_custom_call.1} parent=11 // pred_check_branch
          %171 = sbr.rel (%p169) target = $region24
        $region23: #{tpu_custom_call.1} parent=11 // pred_region
          %s173 = ssub.s32 4096, 4096
          %174 = vsyncadd [#allocation3], %s173
          %s175 = sshll.u32 [#allocation2], 4
          %s176 = int_to_ptr.vmem [resolvable:$true] %s175
          %181 = dma.hbm_to_vmem [thread:$0]  %s3, 4096, %s176, [#allocation3], 128, 128, 8
        $region24: #{tpu_custom_call.1} parent=11 // pred_fallthru
          _
        // Predicated region
        $region25: #{tpu_custom_call.1} parent=11 // pred_check
          %p182 = pneg %p122
        $region26: #{tpu_custom_call.1} parent=11 // pred_check_branch
          %184 = sbr.rel (%p182) target = $region28
        $region27: #{tpu_custom_call.1} parent=11 // pred_region
          _
        $region28: #{tpu_custom_call.1} parent=11 // pred_fallthru
          _
      $region12: #{tpu_custom_call.1} parent=5 // pred_fallthru
        _
      %p185 = scmp.lt.s32.totalorder %s12, 2
      // Predicated region
      $region29: #{tpu_custom_call.1} parent=5 // pred_check
        %p186 = pneg %p185
      $region30: #{tpu_custom_call.1} parent=5 // pred_check_branch
        %188 = sbr.rel (%p186) target = $region32
      $region31: #{tpu_custom_call.1} parent=5 // pred_region
        // Predicated region
        $region33: #{tpu_custom_call.1} parent=31 // pred_check
          %p189 = pneg %p32
        $region34: #{tpu_custom_call.1} parent=31 // pred_check_branch
          %191 = sbr.rel (%p189) target = $region36
        $region35: #{tpu_custom_call.1} parent=31 // pred_region
          %s192 = smul.u32 4, %s12
          %p193 = scmp.lt.s32.totalorder %s192, 7
          %s194 = scalar_select %p193, %s192, 7
          %s195 = smul.addr %s194, 8
          %s196 = scalar_lea.vmem %s0, %s195
          %s197 = smul.u32 4, %s12
        $region36: #{tpu_custom_call.1} parent=31 // pred_fallthru
          _
      $region32: #{tpu_custom_call.1} parent=5 // pred_fallthru
        _
      %p198 = scmp.le.s32.totalorder 1, %s12
      %p199 = scmp.lt.s32.totalorder %s12, 3
      %p200 = pnand %p198, %p199
      %p201 = pneg %p200
      // Predicated region
      $region37: #{tpu_custom_call.1} parent=5 // pred_check
        _
      $region38: #{tpu_custom_call.1} parent=5 // pred_check_branch
        %203 = sbr.rel (%p200) target = $region40
      $region39: #{tpu_custom_call.1} parent=5 // pred_region
        %s204 = ssub.s32 %s12, 1
        // Predicated region
        $region41: #{tpu_custom_call.1} parent=39 // pred_check
          %p205 = pneg %p101
        $region42: #{tpu_custom_call.1} parent=39 // pred_check_branch
          %207 = sbr.rel (%p205) target = $region44
        $region43: #{tpu_custom_call.1} parent=39 // pred_region
          %208 = dma.done [#allocation3], 4096
        $region44: #{tpu_custom_call.1} parent=39 // pred_fallthru
          _
        %s209 = smul.u32 4, %s17
        %p210 = scmp.lt.s32.totalorder %s209, 7
        %s211 = scalar_select %p210, %s209, 7
        %s212 = smul.addr %s211, 8
        %s213 = scalar_lea.vmem %s0, %s212
        %p214 = pneg %p38
        %p215 = pneg %p35
        %p216 = pneg %p59
        %p217 = pneg %p56
        %p218 = pneg %p80
        %p219 = pneg %p77
        %p220 = pneg %p101
        %p221 = pneg %p98
        %p222 = pneg %p122
        %p223 = pneg %p119
        %p224 = pneg %p148
        %p225 = pneg %p145
        %s226 = smul.u32 4, %s17
        %p227 = scmp.lt.s32.totalorder %s226, 7
        %s228 = scalar_select %p227, %s226, 7
        %s229 = smul.addr %s228, 8
        %s230 = scalar_lea.vmem %s5, %s229
        %s231 = smul.u32 4, %s17
        %p232 = scmp.lt.s32.totalorder %s231, 7
        %s233 = scalar_select %p232, %s231, 7
        %s234 = smul.addr %s233, 8
        %s235 = scalar_lea.vmem %s0, %s234
        %s236 = smul.u32 4, %s17
        %s237 = smul.u32 4, %s17
        %p238 = scmp.lt.s32.totalorder %s237, 7
        %s239 = scalar_select %p238, %s237, 7
        %s240 = smul.addr %s239, 8
        %s241 = scalar_lea.vmem %s5, %s240
        %s242 = smul.u32 4, %s17
        %v243 = vld [vmem:[%s235] sm:$0xff]
        %v244 = vld [vmem:[%s235 + $0x8] sm:$0xff]
        %v245 = vld [vmem:[%s235 + $0x10] sm:$0xff]
        %v246 = vld [vmem:[%s235 + $0x18] sm:$0xff]
        %v247 = vld [vmem:[%s1] sm:$0xff]
        %v248 = vld [vmem:[%s1 + $0x8] sm:$0xff]
        %v249 = vld [vmem:[%s2] sm:$0x1]
        %v251 = vlaneseq
        %v252 = vshrl.u32 %v251, 7
        %v253 = vsub.s32 0, %v252
        %v254 = vrot.slane %v249, %v253
        %vm256 = vcmask 130048
        %v258 = vsel %vm256, %v243, 0
        %v261 = vsel %vm256, %v244, 0
        %v264 = vsel %vm256, %v245, 0
        %v267 = vsel %vm256, %v246, 0
        %269 = vmatprep.subr.mxu0 0.0
        %270 = vmatpush1.msra.mxu0 %v247
        %271 = vmatprep.subr.mxu0 0.0
        %272 = vmatpush1.msra.mxu0 %v248
        %273 = vmatprep.subr.mxu0 0.0
        %274 = vmatpush1.msra.mxu0 0.0
        %275 = vmatprep.subr.mxu0 0.0
        %276 = vmatpush1.msra.mxu0 0.0
        %277 = vmatprep.subr.mxu0 0.0
        %278 = vmatpush1.msra.mxu0 0.0
        %279 = vmatprep.subr.mxu0 0.0
        %280 = vmatpush1.msra.mxu0 0.0
        %281 = vmatprep.subr.mxu0 0.0
        %282 = vmatpush1.msra.mxu0 0.0
        %283 = vmatprep.subr.mxu0 0.0
        %284 = vmatpush1.msra.mxu0 0.0
        %285 = vmatprep.subr.mxu0 0.0
        %286 = vmatpush1.msra.mxu0 0.0
        %287 = vmatprep.subr.mxu0 0.0
        %288 = vmatpush1.msra.mxu0 0.0
        %289 = vmatprep.subr.mxu0 0.0
        %290 = vmatpush1.msra.mxu0 0.0
        %291 = vmatprep.subr.mxu0 0.0
        %292 = vmatpush1.msra.mxu0 0.0
        %293 = vmatprep.subr.mxu0 0.0
        %294 = vmatpush1.msra.mxu0 0.0
        %295 = vmatprep.subr.mxu0 0.0
        %296 = vmatpush1.msra.mxu0 0.0
        %297 = vmatprep.subr.mxu0 0.0
        %298 = vmatpush1.msra.mxu0 0.0
        %299 = vmatprep.subr.mxu0 0.0
        %300 = vmatpush1.msra.mxu0 0.0
        %301 = vmatprep.subr.mxu0 0.0
        %302 = vmatpush1.msra.mxu0 0.0
        %303 = vmatprep.subr.mxu0 0.0
        %304 = vmatpush1.msra.mxu0 0.0
        %305 = vmatprep.subr.mxu0 0.0
        %306 = vmatpush1.msra.mxu0 0.0
        %307 = vmatprep.subr.mxu0 0.0
        %308 = vmatpush1.msra.mxu0 0.0
        %309 = vmatprep.subr.mxu0 0.0
        %310 = vmatpush1.msra.mxu0 0.0
        %311 = vmatprep.subr.mxu0 0.0
        %312 = vmatpush1.msra.mxu0 0.0
        %313 = vmatprep.subr.mxu0 0.0
        %314 = vmatpush1.msra.mxu0 0.0
        %315 = vmatprep.subr.mxu0 0.0
        %316 = vmatpush1.msra.mxu0 0.0
        %317 = vmatprep.subr.mxu0 0.0
        %318 = vmatpush1.msra.mxu0 0.0
        %319 = vmatprep.subr.mxu0 0.0
        %320 = vmatpush1.msra.mxu0 0.0
        %321 = vmatprep.subr.mxu0 0.0
        %322 = vmatpush1.msra.mxu0 0.0
        %323 = vmatprep.subr.mxu0 0.0
        %324 = vmatpush1.msra.mxu0 0.0
        %325 = vmatprep.subr.mxu0 0.0
        %326 = vmatpush1.msra.mxu0 0.0
        %327 = vmatprep.subr.mxu0 0.0
        %328 = vmatpush1.msra.mxu0 0.0
        %329 = vmatprep.subr.mxu0 0.0
        %330 = vmatpush1.msra.mxu0 0.0
        %331 = vmatprep.subr.mxu0 0.0
        %332 = vmatpush1.msra.mxu0 0.0
        %333 = vmatprep.mubr.f32.mxu0 0.0
        %334 = vmatmul.mubr.f32.gmra.mrb[0].mxu0 %v258
        %v335 = vpop.f32.mrb[0].mxu0
        %v336 = vadd.f32 %v254, %v335
        %v337 = vpop.f32.mrb[0].mxu0
        %338 = vmatprep.mubr.f32.mxu0 0.0
        %339 = vmatmul.mubr.f32.gmra.mrb[0].mxu0 %v261
        %v340 = vpop.f32.mrb[0].mxu0
        %v341 = vadd.f32 %v254, %v340
        %v342 = vpop.f32.mrb[0].mxu0
        %343 = vmatprep.mubr.f32.mxu0 0.0
        %344 = vmatmul.mubr.f32.gmra.mrb[0].mxu0 %v264
        %v345 = vpop.f32.mrb[0].mxu0
        %v346 = vadd.f32 %v254, %v345
        %v347 = vpop.f32.mrb[0].mxu0
        %348 = vmatprep.mubr.f32.mxu0 0.0
        %349 = vmatmul.mubr.f32.gmra.mrb[0].mxu0 %v267
        %v350 = vpop.f32.mrb[0].mxu0
        %v351 = vadd.f32 %v254, %v350
        %v352 = vpop.f32.mrb[0].mxu0
        %353 = vdwg.mxu0
        %vm354 = vcmp.ge.f32.partialorder %v336, 0.0
        %vm355 = vcmp.ge.f32.partialorder %v341, 0.0
        %vm356 = vcmp.ge.f32.partialorder %v346, 0.0
        %vm357 = vcmp.ge.f32.partialorder %v351, 0.0
        %v358 = vmul.f32 %v336, 0.01
        %v359 = vmul.f32 %v341, 0.01
        %v360 = vmul.f32 %v346, 0.01
        %v361 = vmul.f32 %v351, 0.01
        %v362 = vsel %vm354, %v336, %v358
        %v363 = vsel %vm355, %v341, %v359
        %v364 = vsel %vm356, %v346, %v360
        %v365 = vsel %vm357, %v351, %v361
        %v366 = vld [vmem:[#allocation2] sm:$0xff]
        %v367 = vld [vmem:[#allocation2 + $0x8] sm:$0xff]
        %v368 = vld [vmem:[#allocation2 + $0x10] sm:$0xff]
        %v369 = vld [vmem:[#allocation2 + $0x18] sm:$0xff]
        %v370 = vld [vmem:[#allocation2 + $0x20] sm:$0xff]
        %v371 = vld [vmem:[#allocation2 + $0x28] sm:$0xff]
        %v372 = vld [vmem:[#allocation2 + $0x30] sm:$0xff]
        %v373 = vld [vmem:[#allocation2 + $0x38] sm:$0xff]
        %v374 = vld [vmem:[#allocation2 + $0x40] sm:$0xff]
        %v375 = vld [vmem:[#allocation2 + $0x48] sm:$0xff]
        %v376 = vld [vmem:[#allocation2 + $0x50] sm:$0xff]
        %v377 = vld [vmem:[#allocation2 + $0x58] sm:$0xff]
        %v378 = vld [vmem:[#allocation2 + $0x60] sm:$0xff]
        %v379 = vld [vmem:[#allocation2 + $0x68] sm:$0xff]
        %v380 = vld [vmem:[#allocation2 + $0x70] sm:$0xff]
        %v381 = vld [vmem:[#allocation2 + $0x78] sm:$0xff]
        %v382 = vld [vmem:[%s4] sm:$0x1]
        %v384 = vlaneseq
        %v385 = vshrl.u32 %v384, 7
        %v386 = vsub.s32 0, %v385
        %v387 = vrot.slane %v382, %v386
        %389 = vmatprep.subr.mxu0 0.0
        %390 = vmatpush1.msra.mxu0 %v366
        %391 = vmatprep.subr.mxu0 0.0
        %392 = vmatpush1.msra.mxu0 %v367
        %393 = vmatprep.subr.mxu0 0.0
        %394 = vmatpush1.msra.mxu0 %v368
        %395 = vmatprep.subr.mxu0 0.0
        %396 = vmatpush1.msra.mxu0 %v369
        %397 = vmatprep.subr.mxu0 0.0
        %398 = vmatpush1.msra.mxu0 %v370
        %399 = vmatprep.subr.mxu0 0.0
        %400 = vmatpush1.msra.mxu0 %v371
        %401 = vmatprep.subr.mxu0 0.0
        %402 = vmatpush1.msra.mxu0 %v372
        %403 = vmatprep.subr.mxu0 0.0
        %404 = vmatpush1.msra.mxu0 %v373
        %405 = vmatprep.subr.mxu0 0.0
        %406 = vmatpush1.msra.mxu0 %v374
        %407 = vmatprep.subr.mxu0 0.0
        %408 = vmatpush1.msra.mxu0 %v375
        %409 = vmatprep.subr.mxu0 0.0
        %410 = vmatpush1.msra.mxu0 %v376
        %411 = vmatprep.subr.mxu0 0.0
        %412 = vmatpush1.msra.mxu0 %v377
        %413 = vmatprep.subr.mxu0 0.0
        %414 = vmatpush1.msra.mxu0 %v378
        %415 = vmatprep.subr.mxu0 0.0
        %416 = vmatpush1.msra.mxu0 %v379
        %417 = vmatprep.subr.mxu0 0.0
        %418 = vmatpush1.msra.mxu0 %v380
        %419 = vmatprep.subr.mxu0 0.0
        %420 = vmatpush1.msra.mxu0 %v381
        %421 = vmatprep.subr.mxu0 0.0
        %422 = vmatpush1.msra.mxu0 0.0
        %423 = vmatprep.subr.mxu0 0.0
        %424 = vmatpush1.msra.mxu0 0.0
        %425 = vmatprep.subr.mxu0 0.0
        %426 = vmatpush1.msra.mxu0 0.0
        %427 = vmatprep.subr.mxu0 0.0
        %428 = vmatpush1.msra.mxu0 0.0
        %429 = vmatprep.subr.mxu0 0.0
        %430 = vmatpush1.msra.mxu0 0.0
        %431 = vmatprep.subr.mxu0 0.0
        %432 = vmatpush1.msra.mxu0 0.0
        %433 = vmatprep.subr.mxu0 0.0
        %434 = vmatpush1.msra.mxu0 0.0
        %435 = vmatprep.subr.mxu0 0.0
        %436 = vmatpush1.msra.mxu0 0.0
        %437 = vmatprep.subr.mxu0 0.0
        %438 = vmatpush1.msra.mxu0 0.0
        %439 = vmatprep.subr.mxu0 0.0
        %440 = vmatpush1.msra.mxu0 0.0
        %441 = vmatprep.subr.mxu0 0.0
        %442 = vmatpush1.msra.mxu0 0.0
        %443 = vmatprep.subr.mxu0 0.0
        %444 = vmatpush1.msra.mxu0 0.0
        %445 = vmatprep.subr.mxu0 0.0
        %446 = vmatpush1.msra.mxu0 0.0
        %447 = vmatprep.subr.mxu0 0.0
        %448 = vmatpush1.msra.mxu0 0.0
        %449 = vmatprep.subr.mxu0 0.0
        %450 = vmatpush1.msra.mxu0 0.0
        %451 = vmatprep.subr.mxu0 0.0
        %452 = vmatpush1.msra.mxu0 0.0
        %453 = vmatprep.mubr.f32.mxu0 0.0
        %454 = vmatmul.mubr.f32.gmra.mrb[0].mxu0 %v362
        %v455 = vpop.f32.mrb[0].mxu0
        %v456 = vadd.f32 %v387, %v455
        %v457 = vpop.f32.mrb[0].mxu0
        %458 = vmatprep.mubr.f32.mxu0 0.0
        %459 = vmatmul.mubr.f32.gmra.mrb[0].mxu0 %v363
        %v460 = vpop.f32.mrb[0].mxu0
        %v461 = vadd.f32 %v387, %v460
        %v462 = vpop.f32.mrb[0].mxu0
        %463 = vmatprep.mubr.f32.mxu0 0.0
        %464 = vmatmul.mubr.f32.gmra.mrb[0].mxu0 %v364
        %v465 = vpop.f32.mrb[0].mxu0
        %v466 = vadd.f32 %v387, %v465
        %v467 = vpop.f32.mrb[0].mxu0
        %468 = vmatprep.mubr.f32.mxu0 0.0
        %469 = vmatmul.mubr.f32.gmra.mrb[0].mxu0 %v365
        %v470 = vpop.f32.mrb[0].mxu0
        %v471 = vadd.f32 %v387, %v470
        %v472 = vpop.f32.mrb[0].mxu0
        %473 = vdwg.mxu0
        %vm474 = vcmp.ge.f32.partialorder %v456, 0.0
        %vm475 = vcmp.ge.f32.partialorder %v461, 0.0
        %vm476 = vcmp.ge.f32.partialorder %v466, 0.0
        %vm477 = vcmp.ge.f32.partialorder %v471, 0.0
        %v478 = vmul.f32 %v456, 0.0001
        %v479 = vmul.f32 %v461, 0.0001
        %v480 = vmul.f32 %v466, 0.0001
        %v481 = vmul.f32 %v471, 0.0001
        %v482 = vsel %vm474, %v456, %v478
        %v483 = vsel %vm475, %v461, %v479
        %v484 = vsel %vm476, %v466, %v480
        %v485 = vsel %vm477, %v471, %v481
        %v486 = vadd.f32 %v482, %v362
        %v487 = vadd.f32 %v483, %v363
        %v488 = vadd.f32 %v484, %v364
        %v489 = vadd.f32 %v485, %v365
        %s490 = scalar_lea.vmem [#allocation2], 128
        %v491 = vld [vmem:[%s490] sm:$0xff]
        %v492 = vld [vmem:[%s490 + $0x8] sm:$0xff]
        %v493 = vld [vmem:[%s490 + $0x10] sm:$0xff]
        %v494 = vld [vmem:[%s490 + $0x18] sm:$0xff]
        %v495 = vld [vmem:[%s490 + $0x20] sm:$0xff]
        %v496 = vld [vmem:[%s490 + $0x28] sm:$0xff]
        %v497 = vld [vmem:[%s490 + $0x30] sm:$0xff]
        %v498 = vld [vmem:[%s490 + $0x38] sm:$0xff]
        %v499 = vld [vmem:[%s490 + $0x40] sm:$0xff]
        %v500 = vld [vmem:[%s490 + $0x48] sm:$0xff]
        %v501 = vld [vmem:[%s490 + $0x50] sm:$0xff]
        %v502 = vld [vmem:[%s490 + $0x58] sm:$0xff]
        %v503 = vld [vmem:[%s490 + $0x60] sm:$0xff]
        %v504 = vld [vmem:[%s490 + $0x68] sm:$0xff]
        %v505 = vld [vmem:[%s490 + $0x70] sm:$0xff]
        %v506 = vld [vmem:[%s490 + $0x78] sm:$0xff]
        %s507 = scalar_lea.vmem %s4, 1
        %v508 = vld [vmem:[%s507] sm:$0x1]
        %v510 = vlaneseq
        %v511 = vshrl.u32 %v510, 7
        %v512 = vsub.s32 0, %v511
        %v513 = vrot.slane %v508, %v512
        %515 = vmatprep.subr.mxu0 0.0
        %516 = vmatpush1.msra.mxu0 %v491
        %517 = vmatprep.subr.mxu0 0.0
        %518 = vmatpush1.msra.mxu0 %v492
        %519 = vmatprep.subr.mxu0 0.0
        %520 = vmatpush1.msra.mxu0 %v493
        %521 = vmatprep.subr.mxu0 0.0
        %522 = vmatpush1.msra.mxu0 %v494
        %523 = vmatprep.subr.mxu0 0.0
        %524 = vmatpush1.msra.mxu0 %v495
        %525 = vmatprep.subr.mxu0 0.0
        %526 = vmatpush1.msra.mxu0 %v496
        %527 = vmatprep.subr.mxu0 0.0
        %528 = vmatpush1.msra.mxu0 %v497
        %529 = vmatprep.subr.mxu0 0.0
        %530 = vmatpush1.msra.mxu0 %v498
        %531 = vmatprep.subr.mxu0 0.0
        %532 = vmatpush1.msra.mxu0 %v499
        %533 = vmatprep.subr.mxu0 0.0
        %534 = vmatpush1.msra.mxu0 %v500
        %535 = vmatprep.subr.mxu0 0.0
        %536 = vmatpush1.msra.mxu0 %v501
        %537 = vmatprep.subr.mxu0 0.0
        %538 = vmatpush1.msra.mxu0 %v502
        %539 = vmatprep.subr.mxu0 0.0
        %540 = vmatpush1.msra.mxu0 %v503
        %541 = vmatprep.subr.mxu0 0.0
        %542 = vmatpush1.msra.mxu0 %v504
        %543 = vmatprep.subr.mxu0 0.0
        %544 = vmatpush1.msra.mxu0 %v505
        %545 = vmatprep.subr.mxu0 0.0
        %546 = vmatpush1.msra.mxu0 %v506
        %547 = vmatprep.subr.mxu0 0.0
        %548 = vmatpush1.msra.mxu0 0.0
        %549 = vmatprep.subr.mxu0 0.0
        %550 = vmatpush1.msra.mxu0 0.0
        %551 = vmatprep.subr.mxu0 0.0
        %552 = vmatpush1.msra.mxu0 0.0
        %553 = vmatprep.subr.mxu0 0.0
        %554 = vmatpush1.msra.mxu0 0.0
        %555 = vmatprep.subr.mxu0 0.0
        %556 = vmatpush1.msra.mxu0 0.0
        %557 = vmatprep.subr.mxu0 0.0
        %558 = vmatpush1.msra.mxu0 0.0
        %559 = vmatprep.subr.mxu0 0.0
        %560 = vmatpush1.msra.mxu0 0.0
        %561 = vmatprep.subr.mxu0 0.0
        %562 = vmatpush1.msra.mxu0 0.0
        %563 = vmatprep.subr.mxu0 0.0
        %564 = vmatpush1.msra.mxu0 0.0
        %565 = vmatprep.subr.mxu0 0.0
        %566 = vmatpush1.msra.mxu0 0.0
        %567 = vmatprep.subr.mxu0 0.0
        %568 = vmatpush1.msra.mxu0 0.0
        %569 = vmatprep.subr.mxu0 0.0
        %570 = vmatpush1.msra.mxu0 0.0
        %571 = vmatprep.subr.mxu0 0.0
        %572 = vmatpush1.msra.mxu0 0.0
        %573 = vmatprep.subr.mxu0 0.0
        %574 = vmatpush1.msra.mxu0 0.0
        %575 = vmatprep.subr.mxu0 0.0
        %576 = vmatpush1.msra.mxu0 0.0
        %577 = vmatprep.subr.mxu0 0.0
        %578 = vmatpush1.msra.mxu0 0.0
        %579 = vmatprep.mubr.f32.mxu0 0.0
        %580 = vmatmul.mubr.f32.gmra.mrb[0].mxu0 %v486
        %v581 = vpop.f32.mrb[0].mxu0
        %v582 = vadd.f32 %v513, %v581
        %v583 = vpop.f32.mrb[0].mxu0
        %584 = vmatprep.mubr.f32.mxu0 0.0
        %585 = vmatmul.mubr.f32.gmra.mrb[0].mxu0 %v487
        %v586 = vpop.f32.mrb[0].mxu0
        %v587 = vadd.f32 %v513, %v586
        %v588 = vpop.f32.mrb[0].mxu0
        %589 = vmatprep.mubr.f32.mxu0 0.0
        %590 = vmatmul.mubr.f32.gmra.mrb[0].mxu0 %v488
        %v591 = vpop.f32.mrb[0].mxu0
        %v592 = vadd.f32 %v513, %v591
        %v593 = vpop.f32.mrb[0].mxu0
        %594 = vmatprep.mubr.f32.mxu0 0.0
        %595 = vmatmul.mubr.f32.gmra.mrb[0].mxu0 %v489
        %v596 = vpop.f32.mrb[0].mxu0
        %v597 = vadd.f32 %v513, %v596
        %v598 = vpop.f32.mrb[0].mxu0
        %599 = vdwg.mxu0
        %vm600 = vcmp.ge.f32.partialorder %v582, 0.0
        %vm601 = vcmp.ge.f32.partialorder %v587, 0.0
        %vm602 = vcmp.ge.f32.partialorder %v592, 0.0
        %vm603 = vcmp.ge.f32.partialorder %v597, 0.0
        %v604 = vmul.f32 %v582, 0.0001
        %v605 = vmul.f32 %v587, 0.0001
        %v606 = vmul.f32 %v592, 0.0001
        %v607 = vmul.f32 %v597, 0.0001
        %v608 = vsel %vm600, %v582, %v604
        %v609 = vsel %vm601, %v587, %v605
        %v610 = vsel %vm602, %v592, %v606
        %v611 = vsel %vm603, %v597, %v607
        %v612 = vadd.f32 %v608, %v486
        %v613 = vadd.f32 %v609, %v487
        %v614 = vadd.f32 %v610, %v488
        %v615 = vadd.f32 %v611, %v489
        %616 = vadd.xlane.f32.xlu0 %v612
        %v617 = vpop.xlane.xlu0 %616
        %618 = vadd.xlane.f32.xlu0 %v613
        %v619 = vpop.xlane.xlu0 %618
        %620 = vadd.xlane.f32.xlu0 %v614
        %v621 = vpop.xlane.xlu0 %620
        %622 = vadd.xlane.f32.xlu0 %v615
        %v623 = vpop.xlane.xlu0 %622
        %v624 = vmul.f32 %v617, 0.03125
        %v625 = vmul.f32 %v619, 0.03125
        %v626 = vmul.f32 %v621, 0.03125
        %v627 = vmul.f32 %v623, 0.03125
        %v628 = vsub.f32 %v612, %v624
        %v629 = vsub.f32 %v613, %v625
        %v630 = vsub.f32 %v614, %v626
        %v631 = vsub.f32 %v615, %v627
        %v632 = vmul.f32 %v628, %v628
        %v633 = vmul.f32 %v629, %v629
        %v634 = vmul.f32 %v630, %v630
        %v635 = vmul.f32 %v631, %v631
        %636 = vadd.xlane.f32.xlu0 %v632
        %v637 = vpop.xlane.xlu0 %636
        %638 = vadd.xlane.f32.xlu0 %v633
        %v639 = vpop.xlane.xlu0 %638
        %640 = vadd.xlane.f32.xlu0 %v634
        %v641 = vpop.xlane.xlu0 %640
        %642 = vadd.xlane.f32.xlu0 %v635
        %v643 = vpop.xlane.xlu0 %642
        %v644 = vmul.f32 %v624, %v624
        %v645 = vmul.f32 %v625, %v625
        %v646 = vmul.f32 %v626, %v626
        %v647 = vmul.f32 %v627, %v627
        %v648 = vmul.f32 %v644, 96.0
        %v649 = vmul.f32 %v645, 96.0
        %v650 = vmul.f32 %v646, 96.0
        %v651 = vmul.f32 %v647, 96.0
        %v652 = vsub.f32 %v637, %v648
        %v653 = vsub.f32 %v639, %v649
        %v654 = vsub.f32 %v641, %v650
        %v655 = vsub.f32 %v643, %v651
        %v656 = vmul.f32 %v652, 0.03125
        %v657 = vmul.f32 %v653, 0.03125
        %v658 = vmul.f32 %v654, 0.03125
        %v659 = vmul.f32 %v655, 0.03125
        %v660 = vadd.f32 %v656, 1e-05
        %v661 = vadd.f32 %v657, 1e-05
        %v662 = vadd.f32 %v658, 1e-05
        %v663 = vadd.f32 %v659, 1e-05
        %v664 = vrsqrt.pop %v660
        %v665 = vrsqrt.pop %v661
        %v666 = vrsqrt.pop %v662
        %v667 = vrsqrt.pop %v663
        %v668 = vmul.f32 %v664, 0.5
        %v669 = vmul.f32 %v665, 0.5
        %v670 = vmul.f32 %v666, 0.5
        %v671 = vmul.f32 %v667, 0.5
        %v672 = vmul.f32 %v628, %v668
        %v673 = vmul.f32 %v629, %v669
        %v674 = vmul.f32 %v630, %v670
        %v675 = vmul.f32 %v631, %v671
        %vm676 = vcmask 261120
        %677 = vst.msk [vmem:[%s241] sm:$0xff] %vm676, %v672
        %678 = vst.msk [vmem:[%s241 + $0x8] sm:$0xff] %vm676, %v673
        %679 = vst.msk [vmem:[%s241 + $0x10] sm:$0xff] %vm676, %v674
        %680 = vst.msk [vmem:[%s241 + $0x18] sm:$0xff] %vm676, %v675
        %s681 = smul.u32 4, %s17
        %p682 = scmp.lt.s32.totalorder %s681, 7
        %s683 = scalar_select %p682, %s681, 7
        %s684 = smul.addr %s683, 8
        %s685 = scalar_lea.vmem %s5, %s684
        // Predicated region
        $region45: #{tpu_custom_call.1} parent=39 // pred_check
          %p686 = pneg %p145
        $region46: #{tpu_custom_call.1} parent=39 // pred_check_branch
          %688 = sbr.rel (%p686) target = $region48
        $region47: #{tpu_custom_call.1} parent=39 // pred_region
          %s689 = smul.u32 4, %s17
        $region48: #{tpu_custom_call.1} parent=39 // pred_fallthru
          _
      $region40: #{tpu_custom_call.1} parent=5 // pred_fallthru
        _
      %p690 = scmp.le.s32.totalorder 2, %s12
      // Predicated region
      $region49: #{tpu_custom_call.1} parent=5 // pred_check
        %p691 = pneg %p690
      $region50: #{tpu_custom_call.1} parent=5 // pred_check_branch
        %693 = sbr.rel (%p691) target = $region52
      $region51: #{tpu_custom_call.1} parent=5 // pred_region
        %s694 = ssub.s32 %s12, 2
        // Predicated region
        $region53: #{tpu_custom_call.1} parent=51 // pred_check
          %p695 = pneg %p151
        $region54: #{tpu_custom_call.1} parent=51 // pred_check_branch
          %697 = sbr.rel (%p695) target = $region56
        $region55: #{tpu_custom_call.1} parent=51 // pred_region
          %s698 = smul.u32 4, %s18
          %p699 = scmp.lt.s32.totalorder %s698, 7
          %s700 = scalar_select %p699, %s698, 7
          %s701 = smul.addr %s700, 8
          %s702 = scalar_lea.vmem %s5, %s701
        $region56: #{tpu_custom_call.1} parent=51 // pred_fallthru
          _
      $region52: #{tpu_custom_call.1} parent=5 // pred_fallthru
        _
    $region6: #{tpu_custom_call.1} parent=1 // loop_footer
      %s16 = sadd.s32 1, %s12
    $region7: #{tpu_custom_call.1} parent=1 // loop_footer_branch
      %11 = sbr.rel target = $region3
    $region8: #{tpu_custom_call.1} parent=1 // loop_exit
      _
    %703 = vsyncpa [#allocation3], 1
    %s704 = scalar_lea.sflag [#allocation3], 1
    %705 = vsyncpa %s704, 1

</llo_original>
